<compile_context>
chip_gen: v5e
topology: v5e:2x2
jax: 0.10.0
libtpu: 0.0.40
codegen_flags: <defaults>
</compile_context>

<pallas_src>
import jax
import jax.numpy as jnp
from jax.experimental import pallas as pl
from jax.experimental.pallas import tpu as pltpu


def cluster_kernel(adj_ref, feat_ref, w_fused_ref, b_gc_ref,
                   w_lin_ref, b_lin_ref, out_ref, xw_scr, skip_scr):
    i = pl.program_id(0)
    tm = adj_ref.shape[0]
    H = xw_scr.shape[1]

    # feat-side matmul only once; results persist in VMEM scratch across the
    # (sequential, "arbitrary") row grid.
    @pl.when(i == 0)
    def _():
        xw_both = jnp.dot(feat_ref[...], w_fused_ref[...],
                          preferred_element_type=jnp.float32)   # f32 [N, 2H]
        xw_scr[...] = xw_both[:, :H].astype(jnp.bfloat16)       # feat @ W_conv
        skip_scr[...] = xw_both[:, H:]                          # feat @ W_skip

    row0 = pl.multiple_of(i * tm, tm)
    skip = skip_scr[pl.ds(row0, tm), :]                         # f32 [tm, H]

    # adj row-tile @ (feat @ W_conv): bf16 operands, f32 accumulation
    axw = jnp.dot(adj_ref[...], xw_scr[...],
                  preferred_element_type=jnp.float32)           # f32 [tm, H]

    h = axw + skip + b_gc_ref[...]                              # f32 [tm, H]

    # SELU (torch.nn.SELU constants), f32 epilogue
    alpha = 1.6732632423543772
    scale = 1.0507009873554805
    h = scale * jnp.where(h > 0.0, h, alpha * (jnp.exp(h) - 1.0))

    # Linear(num_hiddens -> C_pad); padded cols carry -1e30 bias -> softmax ~0
    logits = jnp.dot(h.astype(jnp.bfloat16), w_lin_ref[...],
                     preferred_element_type=jnp.float32) + b_lin_ref[...]

    # Softmax over dim=1 (community axis); reciprocal on the (idle) EUP
    m = jnp.max(logits, axis=1, keepdims=True)
    e = jnp.exp(logits - m)
    denom = jnp.sum(e, axis=1, keepdims=True)
    out_ref[...] = e * pl.reciprocal(denom, approx=True)


def _pick_row_tile(n):
    # Largest power-of-two row tile (<=512) that divides N; otherwise keep the
    # whole array as one tile (small / irregular N -> single grid step).
    for tm in (512, 256, 128, 64, 32, 16, 8):
        if n % tm == 0:
            return tm
    return n


def cluster_model_forward(norm_adj, feat, params):
    N, F_dim = feat.shape
    H = params["w_conv"].shape[1]
    C = params["w_lin"].shape[1]
    C_pad = pl.cdiv(C, 128) * 128             # lane-dense output width

    # Zero-runtime-cost prep (folded by XLA outside the kernel)
    adj_b = norm_adj.astype(jnp.bfloat16)
    feat_b = feat.astype(jnp.bfloat16)
    w_fused = jnp.concatenate([params["w_conv"], params["w_skip"]],
                              axis=1).astype(jnp.bfloat16)       # [F, 2H]
    w_lin_pad = (jnp.zeros((H, C_pad), jnp.float32)
                 .at[:, :C].set(params["w_lin"])).astype(jnp.bfloat16)
    b_lin_pad = (jnp.full((1, C_pad), -1e30, jnp.float32)
                 .at[:, :C].set(params["b_lin"]))

    tm = _pick_row_tile(N)
    grid_m = N // tm

    cost = pl.CostEstimate(
        flops=2 * N * F_dim * 2 * H + 2 * N * N * H + 2 * N * H * C_pad,
        transcendentals=N * H + N * C_pad + N,
        bytes_accessed=(N * N * 2 + N * F_dim * 2 + F_dim * 2 * H * 2
                        + H * 4 + H * C_pad * 2 + C_pad * 4 + N * C_pad * 4),
    )

    out_pad = pl.pallas_call(
        cluster_kernel,
        out_shape=jax.ShapeDtypeStruct((N, C_pad), jnp.float32),
        grid=(grid_m,),
        in_specs=[
            pl.BlockSpec((tm, N), lambda i: (i, 0)),           # adj row tile (streamed)
            pl.BlockSpec((N, F_dim), lambda i: (0, 0)),        # feat (resident)
            pl.BlockSpec((F_dim, 2 * H), lambda i: (0, 0)),    # fused conv/skip weight
            pl.BlockSpec((1, H), lambda i: (0, 0)),            # b_gc
            pl.BlockSpec((H, C_pad), lambda i: (0, 0)),        # w_lin (lane-padded)
            pl.BlockSpec((1, C_pad), lambda i: (0, 0)),        # b_lin (lane-padded)
        ],
        out_specs=pl.BlockSpec((tm, C_pad), lambda i: (i, 0)),
        scratch_shapes=[
            pltpu.VMEM((N, H), jnp.bfloat16),                  # feat @ W_conv
            pltpu.VMEM((N, H), jnp.float32),                   # feat @ W_skip
        ],
        cost_estimate=cost,
        compiler_params=pltpu.CompilerParams(
            # "arbitrary": grid runs sequentially on one TC so the step-0
            # scratch init is visible to every later row tile.
            dimension_semantics=("arbitrary",),
            vmem_limit_bytes=64 * 1024 * 1024,
        ),
    )(adj_b, feat_b, w_fused, params["b_gc"], w_lin_pad, b_lin_pad)

    return out_pad[:, :C]


def init_params(key, num_feats, num_hiddens, num_communites):
    k1, k2, k3, k4, k5 = jax.random.split(key, 5)
    s_gc = 1.0 / jnp.sqrt(num_feats)
    s_lin = 1.0 / jnp.sqrt(num_hiddens)
    return {
        "w_conv": jax.random.uniform(k1, (num_feats, num_hiddens), jnp.float32, -s_gc, s_gc),
        "w_skip": jax.random.uniform(k2, (num_feats, num_hiddens), jnp.float32, -s_gc, s_gc),
        "b_gc":   jax.random.uniform(k3, (1, num_hiddens), jnp.float32, -s_gc, s_gc),
        "w_lin":  jax.random.uniform(k4, (num_hiddens, num_communites), jnp.float32, -s_lin, s_lin),
        "b_lin":  jax.random.uniform(k5, (1, num_communites), jnp.float32, -s_lin, s_lin),
    }


if __name__ == "__main__":
    num_nodes = 16
    num_feats = 32
    num_hiddens = 32
    num_communites = 8

    key = jax.random.PRNGKey(0)
    k_adj, k_feat, k_params = jax.random.split(key, 3)

    # symmetric, degree-normalized adjacency (dense), as fed to the torch model
    a = jax.random.uniform(k_adj, (num_nodes, num_nodes), jnp.float32)
    a = (a + a.T) * 0.5
    a = a + jnp.eye(num_nodes, dtype=jnp.float32)
    d_inv_sqrt = 1.0 / jnp.sqrt(jnp.sum(a, axis=1))
    norm_adj = a * d_inv_sqrt[:, None] * d_inv_sqrt[None, :]

    feat = jax.random.normal(k_feat, (num_nodes, num_feats), jnp.float32)
    params = init_params(k_params, num_feats, num_hiddens, num_communites)

    fwd = jax.jit(cluster_model_forward)
    S = fwd(norm_adj, feat, params)
    S = jax.block_until_ready(S)

    # sanity: shape + softmax rows sum to 1 (bf16 matmuls + approx reciprocal
    # introduce ~1e-3-level deviations)
    assert S.shape == (num_nodes, num_communites)
    assert bool(jnp.all(S >= 0.0))
    assert jnp.allclose(jnp.sum(S, axis=1), 1.0, atol=1e-2)
    print("KERNEL_OK")
</pallas_src>

<mosaic_0001>
module attributes {stable_mosaic.version = 11 : i64} {
  func.func @cluster_kernel(%arg0: i32, %arg1: memref<16x16xbf16, #tpu.memory_space<vmem>>, %arg2: memref<16x32xbf16, #tpu.memory_space<vmem>>, %arg3: memref<32x64xbf16, #tpu.memory_space<vmem>>, %arg4: memref<1x32xf32, #tpu.memory_space<vmem>>, %arg5: memref<32x128xbf16, #tpu.memory_space<vmem>>, %arg6: memref<1x128xf32, #tpu.memory_space<vmem>>, %arg7: memref<16x128xf32, #tpu.memory_space<vmem>>, %arg8: memref<16x32xbf16, #tpu.memory_space<vmem>>, %arg9: memref<16x32xf32, #tpu.memory_space<vmem>>) attributes {dimension_semantics = [#tpu.dimension_semantics<arbitrary>], iteration_bounds = array<i64: 1>, scalar_prefetch = 0 : i64, scratch_operands = 2 : i64, tpu.core_type = #tpu.core_type<tc>, window_params = [{transform_indices = @transform_0, window_bounds = array<i64: 16, 16>}, {pipeline_mode = #tpu.pipeline_mode<synchronous>, transform_indices = @transform_1, window_bounds = array<i64: 16, 32>}, {pipeline_mode = #tpu.pipeline_mode<synchronous>, transform_indices = @transform_2, window_bounds = array<i64: 32, 64>}, {pipeline_mode = #tpu.pipeline_mode<synchronous>, transform_indices = @transform_3, window_bounds = array<i64: 1, 32>}, {pipeline_mode = #tpu.pipeline_mode<synchronous>, transform_indices = @transform_4, window_bounds = array<i64: 32, 128>}, {pipeline_mode = #tpu.pipeline_mode<synchronous>, transform_indices = @transform_5, window_bounds = array<i64: 1, 128>}, {transform_indices = @transform_6, window_bounds = array<i64: 16, 128>}]} {
    %c0_i32 = arith.constant 0 : i32
    %0 = arith.cmpi eq, %arg0, %c0_i32 : i32
    %1 = arith.extui %0 : i1 to i32
    %c0_i32_0 = arith.constant 0 : i32
    %2 = arith.cmpi ne, %1, %c0_i32_0 : i32
    scf.if %2 {
      %c0_20 = arith.constant 0 : index
      %c0_21 = arith.constant 0 : index
      %41 = vector.load %arg2[%c0_20, %c0_21] : memref<16x32xbf16, #tpu.memory_space<vmem>>, vector<16x32xbf16>
      %c0_22 = arith.constant 0 : index
      %c0_23 = arith.constant 0 : index
      %42 = vector.load %arg3[%c0_22, %c0_23] : memref<32x64xbf16, #tpu.memory_space<vmem>>, vector<32x64xbf16>
      %cst_24 = arith.constant dense<0.000000e+00> : vector<16x64xf32>
      %43 = tpu.matmul %41, %42, %cst_24 {dimension_numbers = #tpu.dot_dimension_numbers<[1], [0], [0], [1], [0, 0, 1, 1], [], []>} : vector<16x32xbf16>, vector<32x64xbf16>, vector<16x64xf32> -> vector<16x64xf32>
      %44 = vector.extract_strided_slice %43 {offsets = [0, 0], sizes = [16, 32], strides = [1, 1]} : vector<16x64xf32> to vector<16x32xf32>
      %45 = arith.truncf %44 : vector<16x32xf32> to vector<16x32xbf16>
      %c0_25 = arith.constant 0 : index
      %c0_26 = arith.constant 0 : index
      %46 = vector.load %arg8[%c0_25, %c0_26] : memref<16x32xbf16, #tpu.memory_space<vmem>>, vector<16x32xbf16>
      tpu.vector_store %arg8[%c0_25, %c0_26], %45 {strides = array<i32>} : memref<16x32xbf16, #tpu.memory_space<vmem>>, vector<16x32xbf16>,
      %47 = vector.extract_strided_slice %43 {offsets = [0, 32], sizes = [16, 32], strides = [1, 1]} : vector<16x64xf32> to vector<16x32xf32>
      %c0_27 = arith.constant 0 : index
      %c0_28 = arith.constant 0 : index
      %48 = vector.load %arg9[%c0_27, %c0_28] : memref<16x32xf32, #tpu.memory_space<vmem>>, vector<16x32xf32>
      tpu.vector_store %arg9[%c0_27, %c0_28], %47 {strides = array<i32>} : memref<16x32xf32, #tpu.memory_space<vmem>>, vector<16x32xf32>,
    } else {
    }
    %c16_i32 = arith.constant 16 : i32
    %3 = arith.muli %arg0, %c16_i32 : i32
    %4 = tpu.assume_multiple %3, 16 : i32
    %5 = arith.index_cast %4 : i32 to index
    %c0 = arith.constant 0 : index
    %6 = vector.load %arg9[%5, %c0] : memref<16x32xf32, #tpu.memory_space<vmem>>, vector<16x32xf32>
    %c0_1 = arith.constant 0 : index
    %c0_2 = arith.constant 0 : index
    %7 = vector.load %arg1[%c0_1, %c0_2] : memref<16x16xbf16, #tpu.memory_space<vmem>>, vector<16x16xbf16>
    %c0_3 = arith.constant 0 : index
    %c0_4 = arith.constant 0 : index
    %8 = vector.load %arg8[%c0_3, %c0_4] : memref<16x32xbf16, #tpu.memory_space<vmem>>, vector<16x32xbf16>
    %cst = arith.constant dense<0.000000e+00> : vector<16x32xf32>
    %9 = tpu.matmul %7, %8, %cst {dimension_numbers = #tpu.dot_dimension_numbers<[1], [0], [0], [1], [0, 0, 1, 1], [], []>} : vector<16x16xbf16>, vector<16x32xbf16>, vector<16x32xf32> -> vector<16x32xf32>
    %10 = arith.addf %9, %6 : vector<16x32xf32>
    %c0_5 = arith.constant 0 : index
    %c0_6 = arith.constant 0 : index
    %11 = vector.load %arg4[%c0_5, %c0_6] : memref<1x32xf32, #tpu.memory_space<vmem>>, vector<1x32xf32>
    %12 = vector.broadcast %11 : vector<1x32xf32> to vector<16x32xf32>
    %13 = arith.addf %10, %12 : vector<16x32xf32>
    %cst_7 = arith.constant 0.000000e+00 : f32
    %14 = vector.broadcast %cst_7 : f32 to vector<16x32xf32>
    %15 = arith.cmpf ogt, %13, %14 : vector<16x32xf32>
    %16 = math.exp %13 : vector<16x32xf32>
    %cst_8 = arith.constant 1.000000e+00 : f32
    %17 = vector.broadcast %cst_8 : f32 to vector<16x32xf32>
    %18 = arith.subf %16, %17 : vector<16x32xf32>
    %cst_9 = arith.constant 1.67326319 : f32
    %19 = vector.broadcast %cst_9 : f32 to vector<16x32xf32>
    %20 = arith.mulf %19, %18 : vector<16x32xf32>
    %21 = arith.select %15, %13, %20 : vector<16x32xi1>, vector<16x32xf32>
    %cst_10 = arith.constant 1.05070102 : f32
    %22 = vector.broadcast %cst_10 : f32 to vector<16x32xf32>
    %23 = arith.mulf %22, %21 : vector<16x32xf32>
    %24 = arith.truncf %23 : vector<16x32xf32> to vector<16x32xbf16>
    %c0_11 = arith.constant 0 : index
    %c0_12 = arith.constant 0 : index
    %25 = vector.load %arg5[%c0_11, %c0_12] : memref<32x128xbf16, #tpu.memory_space<vmem>>, vector<32x128xbf16>
    %cst_13 = arith.constant dense<0.000000e+00> : vector<16x128xf32>
    %26 = tpu.matmul %24, %25, %cst_13 {dimension_numbers = #tpu.dot_dimension_numbers<[1], [0], [0], [1], [0, 0, 1, 1], [], []>} : vector<16x32xbf16>, vector<32x128xbf16>, vector<16x128xf32> -> vector<16x128xf32>
    %c0_14 = arith.constant 0 : index
    %c0_15 = arith.constant 0 : index
    %27 = vector.load %arg6[%c0_14, %c0_15] : memref<1x128xf32, #tpu.memory_space<vmem>>, vector<1x128xf32>
    %28 = vector.broadcast %27 : vector<1x128xf32> to vector<16x128xf32>
    %29 = arith.addf %26, %28 : vector<16x128xf32>
    %cst_16 = arith.constant dense<0xFF800000> : vector<16xf32>
    %30 = vector.multi_reduction <maximumf>, %29, %cst_16 [1] : vector<16x128xf32> to vector<16xf32>
    %31 = vector.shape_cast %30 : vector<16xf32> to vector<16x1xf32>
    %32 = vector.broadcast %31 : vector<16x1xf32> to vector<16x128xf32>
    %33 = arith.subf %29, %32 : vector<16x128xf32>
    %34 = math.exp %33 : vector<16x128xf32>
    %cst_17 = arith.constant dense<0.000000e+00> : vector<16xf32>
    %35 = vector.multi_reduction <add>, %34, %cst_17 [1] : vector<16x128xf32> to vector<16xf32>
    %36 = vector.shape_cast %35 : vector<16xf32> to vector<16x1xf32>
    %37 = tpu.reciprocal %36 {approx = true} : vector<16x1xf32> -> vector<16x1xf32>
    %38 = vector.broadcast %37 : vector<16x1xf32> to vector<16x128xf32>
    %39 = arith.mulf %34, %38 : vector<16x128xf32>
    %c0_18 = arith.constant 0 : index
    %c0_19 = arith.constant 0 : index
    %40 = vector.load %arg7[%c0_18, %c0_19] : memref<16x128xf32, #tpu.memory_space<vmem>>, vector<16x128xf32>
    tpu.vector_store %arg7[%c0_18, %c0_19], %39 {strides = array<i32>} : memref<16x128xf32, #tpu.memory_space<vmem>>, vector<16x128xf32>,
    return
  }
  func.func @transform_0(%arg0: i32) -> (i32, i32) {
    %c0_i32 = arith.constant 0 : i32
    %c0_i32_0 = arith.constant 0 : i32
    return %arg0, %c0_i32 : i32, i32
  }
  func.func @transform_1(%arg0: i32) -> (i32, i32) {
    %c0_i32 = arith.constant 0 : i32
    %c0_i32_0 = arith.constant 0 : i32
    %c0_i32_1 = arith.constant 0 : i32
    return %c0_i32, %c0_i32_0 : i32, i32
  }
  func.func @transform_2(%arg0: i32) -> (i32, i32) {
    %c0_i32 = arith.constant 0 : i32
    %c0_i32_0 = arith.constant 0 : i32
    %c0_i32_1 = arith.constant 0 : i32
    return %c0_i32, %c0_i32_0 : i32, i32
  }
  func.func @transform_3(%arg0: i32) -> (i32, i32) {
    %c0_i32 = arith.constant 0 : i32
    %c0_i32_0 = arith.constant 0 : i32
    %c0_i32_1 = arith.constant 0 : i32
    return %c0_i32, %c0_i32_0 : i32, i32
  }
  func.func @transform_4(%arg0: i32) -> (i32, i32) {
    %c0_i32 = arith.constant 0 : i32
    %c0_i32_0 = arith.constant 0 : i32
    %c0_i32_1 = arith.constant 0 : i32
    return %c0_i32, %c0_i32_0 : i32, i32
  }
  func.func @transform_5(%arg0: i32) -> (i32, i32) {
    %c0_i32 = arith.constant 0 : i32
    %c0_i32_0 = arith.constant 0 : i32
    %c0_i32_1 = arith.constant 0 : i32
    return %c0_i32, %c0_i32_0 : i32, i32
  }
  func.func @transform_6(%arg0: i32) -> (i32, i32) {
    %c0_i32 = arith.constant 0 : i32
    %c0_i32_0 = arith.constant 0 : i32
    return %arg0, %c0_i32 : i32, i32
  }
}

</mosaic_0001>

<llo_original>
// kernel: cluster_model_forward.1
$region0: #{cluster_model_forward.1}
  #allocation0 [shape = 'u32[]', space=smem, size = 0x4, offset = 0x4, fixed_abs, tag = 'smem constant byte address 0x4 - core index']
  #allocation1 [shape = 'u32[72,128]{1,0:T(1,128)}', space=vmem, size = 0x9000, scoped, tag = 'internal scratch']
  #allocation2 [shape = 'bf16[16,32]{1,0:T(8,128)(2,1)}', space=vmem, size = 0x1000, scoped, tag = 'scratch operand']
  #allocation3 [shape = 'f32[16,32]{1,0:T(8,128)}', space=vmem, size = 0x2000, scoped, tag = 'scratch operand']
  %s0 = inlined_call_operand.vmem [shape: bf16[16,16], index: 0, kind: input, shape index: {}]
  %s1 = inlined_call_operand.vmem [shape: bf16[16,32], index: 1, kind: input, shape index: {}]
  %s2 = inlined_call_operand.vmem [shape: bf16[32,64], index: 2, kind: input, shape index: {}]
  %s3 = inlined_call_operand.vmem [shape: f32[1,32], index: 3, kind: input, shape index: {}]
  %s4 = inlined_call_operand.vmem [shape: bf16[32,128], index: 4, kind: input, shape index: {}]
  %s5 = inlined_call_operand.vmem [shape: f32[1,128], index: 5, kind: input, shape index: {}]
  %s6 = inlined_call_operand.vmem [shape: f32[16,128], index: 6, kind: output, shape index: {}]
  %s7 = sld [smem:[#allocation0]]
  $region38: #{cluster_model_forward.1} parent=0
    _
  %s9 = ssub.s32 1, %s7
  %s10 = scalar_select 0, %s9, %s7
  // Predicated region
  $region2: #{cluster_model_forward.1} parent=0 // pred_check
    _
  $region3: #{cluster_model_forward.1} parent=0 // pred_check_branch
    %12 = sbr.rel (0) target = $region5
  $region4: #{cluster_model_forward.1} parent=0 // pred_region
    _
  $region5: #{cluster_model_forward.1} parent=0 // pred_fallthru
    _
  // Predicated region
  $region6: #{cluster_model_forward.1} parent=0 // pred_check
    _
  $region7: #{cluster_model_forward.1} parent=0 // pred_check_branch
    %14 = sbr.rel (0) target = $region9
  $region8: #{cluster_model_forward.1} parent=0 // pred_region
    _
  $region9: #{cluster_model_forward.1} parent=0 // pred_fallthru
    _
  // Predicated region
  $region10: #{cluster_model_forward.1} parent=0 // pred_check
    _
  $region11: #{cluster_model_forward.1} parent=0 // pred_check_branch
    %16 = sbr.rel (0) target = $region13
  $region12: #{cluster_model_forward.1} parent=0 // pred_region
    _
  $region13: #{cluster_model_forward.1} parent=0 // pred_fallthru
    _
  // Predicated region
  $region14: #{cluster_model_forward.1} parent=0 // pred_check
    _
  $region15: #{cluster_model_forward.1} parent=0 // pred_check_branch
    %18 = sbr.rel (0) target = $region17
  $region16: #{cluster_model_forward.1} parent=0 // pred_region
    _
  $region17: #{cluster_model_forward.1} parent=0 // pred_fallthru
    _
  // Predicated region
  $region18: #{cluster_model_forward.1} parent=0 // pred_check
    _
  $region19: #{cluster_model_forward.1} parent=0 // pred_check_branch
    %20 = sbr.rel (0) target = $region21
  $region20: #{cluster_model_forward.1} parent=0 // pred_region
    _
  $region21: #{cluster_model_forward.1} parent=0 // pred_fallthru
    _
  // Predicated region
  $region22: #{cluster_model_forward.1} parent=0 // pred_check
    _
  $region23: #{cluster_model_forward.1} parent=0 // pred_check_branch
    %22 = sbr.rel (0) target = $region25
  $region24: #{cluster_model_forward.1} parent=0 // pred_region
    _
  $region25: #{cluster_model_forward.1} parent=0 // pred_fallthru
    _
  %p24 = scmp.eq.s32.totalorder 0, 0
  // Predicated region
  $region26: #{cluster_model_forward.1} parent=0 // pred_check
    %p25 = pneg %p24
  $region27: #{cluster_model_forward.1} parent=0 // pred_check_branch
    %27 = sbr.rel (%p25) target = $region29
  $region28: #{cluster_model_forward.1} parent=0 // pred_region
    %v28 = vld [vmem:[%s1] sm:$0xf]
    %v29 = vld [vmem:[%s1 + $0x4] sm:$0xf]
    %v30 = vld [vmem:[%s2] sm:$0xf]
    %v31 = vld [vmem:[%s2 + $0x4] sm:$0xf]
    %v32 = vld [vmem:[%s2 + $0x8] sm:$0xf]
    %v33 = vld [vmem:[%s2 + $0xc] sm:$0xf]
    %v36 = vunpack.c.l.b16 %v28
    %v37 = vunpack.c.l.b16 %v29
    %v38 = vpack.c.b16 %v37, %v36
    %v43 = vunpack.c.l.b16 %v30
    %v44 = vunpack.c.l.b16 %v31
    %v45 = vunpack.c.l.b16 %v32
    %v46 = vunpack.c.l.b16 %v33
    %v47 = vpack.c.b16 %v44, %v43
    %v48 = vpack.c.b16 %v46, %v45
    %vm51 = vcmask 261120
    %v53 = vsel %vm51, %v38, 0
    %55 = vmatpush.bf16.msra.mxu0 0
    %56 = vmatpush.bf16.msra.mxu0 0
    %57 = vmatpush.bf16.msra.mxu0 0
    %58 = vmatpush.bf16.msra.mxu0 0
    %59 = vmatpush.bf16.msra.mxu0 0
    %60 = vmatpush.bf16.msra.mxu0 0
    %61 = vmatpush.bf16.msra.mxu0 %v48
    %62 = vmatpush.bf16.msra.mxu0 %v47
    %63 = vmatmul.bf16.gmra.mxu0 %v53
    %v64 = vpop.f32.mrf.mxu0
    %v65 = vadd.f32 0.0, %v64
    %v66 = vpop.f32.mrf.mxu0
    %v67 = vadd.f32 0.0, %v66
    %68 = vdwg.mxu0
    %v69 = vpack.c.bf16 %v65, %v65
    %v70 = vpack.c.bf16 %v67, %v67
    %vm71 = vcmask 257024
    %72 = vst.msk [vmem:[#allocation2] sm:$0xf] %vm71, %v69
    %73 = vst.msk [vmem:[#allocation2 + $0x4] sm:$0xf] %vm71, %v70
    %76 = vrot.lane.b32.xlu0 %v65, 96
    %v77 = vpop.permute.xlu0 %76
    %78 = vrot.lane.b32.xlu0 %v67, 96
    %v79 = vpop.permute.xlu0 %78
    %82 = vst.msk [vmem:[#allocation3] sm:$0xff] %vm51, %v77
    %83 = vst.msk [vmem:[#allocation3 + $0x8] sm:$0xff] %vm51, %v79
  $region29: #{cluster_model_forward.1} parent=0 // pred_fallthru
    _
  %s84 = smul.u32 0, 16
  %s85 = scalar_lea.vmem [#allocation3], %s84
  %v86 = vld [vmem:[%s85] sm:$0xff]
  %v87 = vld [vmem:[%s85 + $0x8] sm:$0xff]
  %v88 = vld [vmem:[%s0] sm:$0xf]
  %v89 = vld [vmem:[%s0 + $0x4] sm:$0xf]
  %v90 = vld [vmem:[#allocation2] sm:$0xf]
  %v91 = vld [vmem:[#allocation2 + $0x4] sm:$0xf]
  %v94 = vunpack.c.l.b16 %v88
  %v95 = vunpack.c.l.b16 %v89
  %v96 = vpack.c.b16 %v95, %v94
  %v99 = vunpack.c.l.b16 %v90
  %v100 = vunpack.c.l.b16 %v91
  %v101 = vpack.c.b16 %v100, %v99
  %vm103 = vcmask 130048
  %v105 = vsel %vm103, %v96, 0
  %107 = vmatpush.bf16.msra.mxu0 0
  %108 = vmatpush.bf16.msra.mxu0 0
  %109 = vmatpush.bf16.msra.mxu0 0
  %110 = vmatpush.bf16.msra.mxu0 0
  %111 = vmatpush.bf16.msra.mxu0 0
  %112 = vmatpush.bf16.msra.mxu0 0
  %113 = vmatpush.bf16.msra.mxu0 0
  %114 = vmatpush.bf16.msra.mxu0 %v101
  %115 = vmatmul.bf16.gmra.mxu0 %v105
  %v116 = vpop.f32.mrf.mxu0
  %v117 = vadd.f32 %v86, %v116
  %v118 = vpop.f32.mrf.mxu0
  %v119 = vadd.f32 %v87, %v118
  %120 = vdwg.mxu0
  %v121 = vld [vmem:[%s3] sm:$0x1]
  %v123 = vperm.slane %v121, 0
  %v125 = vadd.f32 %v117, %v123
  %v126 = vadd.f32 %v119, %v123
  %vm127 = vcmp.gt.f32.partialorder %v125, 0.0
  %vm128 = vcmp.gt.f32.partialorder %v126, 0.0
  %v129 = vmul.f32 %v125, 1.442695
  %v130 = vpow.pop %v129
  %v131 = vmul.f32 %v126, 1.442695
  %v132 = vpow.pop %v131
  %v133 = vsub.f32 %v130, 1.0
  %v134 = vsub.f32 %v132, 1.0
  %v135 = vmul.f32 %v133, 1.6732632
  %v136 = vmul.f32 %v134, 1.6732632
  %v137 = vsel %vm127, %v125, %v135
  %v138 = vsel %vm128, %v126, %v136
  %v139 = vmul.f32 %v137, 1.050701
  %v140 = vmul.f32 %v138, 1.050701
  %v141 = vpack.c.bf16 %v140, %v139
  %v142 = vld [vmem:[%s4] sm:$0xf]
  %v143 = vld [vmem:[%s4 + $0x4] sm:$0xf]
  %v144 = vld [vmem:[%s4 + $0x8] sm:$0xf]
  %v145 = vld [vmem:[%s4 + $0xc] sm:$0xf]
  %v146 = vld [vmem:[%s5] sm:$0x1]
  %v148 = vperm.slane %v146, 0
  %v154 = vunpack.c.l.b16 %v142
  %v155 = vunpack.c.l.b16 %v143
  %v156 = vunpack.c.l.b16 %v144
  %v157 = vunpack.c.l.b16 %v145
  %v158 = vpack.c.b16 %v155, %v154
  %v159 = vpack.c.b16 %v157, %v156
  %vm162 = vcmask 261120
  %v164 = vsel %vm162, %v141, 0
  %166 = vmatpush.bf16.msra.mxu0 0
  %167 = vmatpush.bf16.msra.mxu0 0
  %168 = vmatpush.bf16.msra.mxu0 0
  %169 = vmatpush.bf16.msra.mxu0 0
  %170 = vmatpush.bf16.msra.mxu0 0
  %171 = vmatpush.bf16.msra.mxu0 0
  %172 = vmatpush.bf16.msra.mxu0 %v159
  %173 = vmatpush.bf16.msra.mxu0 %v158
  %174 = vmatmul.bf16.gmra.mxu0 %v164
  %v175 = vpop.f32.mrf.mxu0
  %v176 = vadd.f32 %v148, %v175
  %v177 = vpop.f32.mrf.mxu0
  %v178 = vadd.f32 %v148, %v177
  %179 = vdwg.mxu0
  %180 = vmax.xlane.f32.xlu0 %v176
  %v181 = vpop.xlane.xlu0 %180
  %182 = vmax.xlane.f32.xlu0 %v178
  %v183 = vpop.xlane.xlu0 %182
  %v184 = vsub.f32 %v176, %v181
  %v185 = vsub.f32 %v178, %v183
  %v186 = vmul.f32 %v184, 1.442695
  %v187 = vpow.pop %v186
  %v188 = vmul.f32 %v185, 1.442695
  %v189 = vpow.pop %v188
  %190 = vadd.xlane.f32.xlu0 %v187
  %v191 = vpop.xlane.xlu0 %190
  %192 = vadd.xlane.f32.xlu0 %v189
  %v193 = vpop.xlane.xlu0 %192
  %v194 = vrcp.pop %v191
  %v195 = vrcp.pop %v193
  %v196 = vmul.f32 %v187, %v194
  %v197 = vmul.f32 %v189, %v195
  %198 = vst [vmem:[%s6] sm:$0xff] %v196
  %199 = vst [vmem:[%s6 + $0x8] sm:$0xff] %v197
  // Predicated region
  $region30: #{cluster_model_forward.1} parent=0 // pred_check
    _
  $region31: #{cluster_model_forward.1} parent=0 // pred_check_branch
    %201 = sbr.rel (0) target = $region33
  $region32: #{cluster_model_forward.1} parent=0 // pred_region
    _
  $region33: #{cluster_model_forward.1} parent=0 // pred_fallthru
    _
  // Predicated region
  $region34: #{cluster_model_forward.1} parent=0 // pred_check
    _
  $region35: #{cluster_model_forward.1} parent=0 // pred_check_branch
    %203 = sbr.rel (0) target = $region37
  $region36: #{cluster_model_forward.1} parent=0 // pred_region
    _
  $region37: #{cluster_model_forward.1} parent=0 // pred_fallthru
    _

</llo_original>
